<compile_context>
chip_gen: v7x
topology: tpu7x:2x2x1
jax: 0.10.0
libtpu: 0.0.40
codegen_flags: <defaults>
</compile_context>

<pallas_src>
import functools

import jax
import jax.numpy as jnp
from jax import lax
from jax.experimental import pallas as pl
from jax.experimental.pallas import tpu as pltpu


_MAX_TILE_ELEMS = (4 * 1024 * 1024) // 4   # ~1M elements ≈ 4 MiB of f32 per logits tile
_MAX_BLOCK_B = 2048                        # [TB,1] scratches lane-pad 128x; keep TB modest


def _mixup_ce_kernel(logits_ref, g_ref, out_ref, m_sc, s_sc,
                     *, n_rows, n_cols, block_b, block_c):
    i = pl.program_id(0)          # batch-tile index ("parallel")
    k = pl.program_id(1)          # class-tile index (reduction axis, innermost)
    nk = pl.num_programs(1)

    # ---- init running LSE state at the start of each batch tile ------------
    @pl.when(k == 0)
    def _():
        m_sc[...] = jnp.full(m_sc.shape, -jnp.inf, dtype=jnp.float32)
        s_sc[...] = jnp.zeros(s_sc.shape, dtype=jnp.float32)

    # ---- load tile; upcast in-kernel (bf16 travels as bf16 over HBM) -------
    x = logits_ref[...].astype(jnp.float32)                        # [TB, TC]
    if n_cols % block_c != 0:
        # Mask padded columns of the ragged last class tile so they never win
        # the max / contribute to sum-exp.  (1, TC) iota + compare, broadcast.
        col_ids = k * block_c + lax.broadcasted_iota(jnp.int32, (1, block_c), 1)
        x = jnp.where(col_ids < n_cols, x, -1e30)

    # ---- online (flash-style) log-sum-exp over the class (lane) axis -------
    m_prev = m_sc[...]                                             # [TB, 1]
    m_new = jnp.maximum(m_prev, jnp.max(x, axis=-1, keepdims=True))
    s_sc[...] = (s_sc[...] * jnp.exp(m_prev - m_new)
                 + jnp.sum(jnp.exp(x - m_new), axis=-1, keepdims=True))
    m_sc[...] = m_new

    # ---- finalize this batch tile: emit its partial sum of row losses ------
    @pl.when(k == nk - 1)
    def _():
        # per-row mixup CE: lse_i - (lam*logit[ta_i] + (1-lam)*logit[tb_i])
        row_loss = m_sc[...] + jnp.log(s_sc[...]) - g_ref[...]     # [TB, 1]
        if n_rows % block_b != 0:
            row_ids = i * block_b + lax.broadcasted_iota(
                jnp.int32, (block_b, 1), 0)
            row_loss = jnp.where(row_ids < n_rows, row_loss, 0.0)   # select, not mul
        out_ref[...] = jnp.broadcast_to(jnp.sum(row_loss), out_ref.shape)


def _choose_tiles(n_rows, n_cols):
    # Class tile: full C when it fits the element budget with >= 8 rows,
    # otherwise the largest multiple of 128 that does.
    if n_cols * 8 <= _MAX_TILE_ELEMS:
        block_c = n_cols
    else:
        block_c = max(128, (_MAX_TILE_ELEMS // 8) // 128 * 128)
    # Batch tile: as many rows as the budget allows (multiple of 8, capped),
    # or the full (possibly non-multiple-of-8) batch when it fits entirely.
    rows_fit = max(8, min(_MAX_BLOCK_B, (_MAX_TILE_ELEMS // block_c) // 8 * 8))
    block_b = n_rows if n_rows <= rows_fit else rows_fit
    return block_b, block_c


def mixup_cross_entropy(logits, targets_a, targets_b, lam,
                        *, block_b=None, block_c=None):
    """lam * CE(logits, targets_a) + (1 - lam) * CE(logits, targets_b), mean over B."""
    B, C = logits.shape
    itemsize = jnp.dtype(logits.dtype).itemsize
    bb_dflt, bc_dflt = _choose_tiles(B, C)
    block_b = bb_dflt if block_b is None else block_b
    block_c = bc_dflt if block_c is None else block_c
    gb = pl.cdiv(B, block_b)
    gc = pl.cdiv(C, block_c)

    lam = jnp.asarray(lam, jnp.float32)
    ta = targets_a.astype(jnp.int32)[:, None]
    tb = targets_b.astype(jnp.int32)[:, None]
    # Tiny O(B) gather done by XLA in the wrapper (NOT the O(B*C) pre-scale
    # anti-pattern): removes all one-hot work from the streaming kernel.
    la = jnp.take_along_axis(logits, ta, axis=-1).astype(jnp.float32)
    lb = jnp.take_along_axis(logits, tb, axis=-1).astype(jnp.float32)
    g = lam * la + (1.0 - lam) * lb                                # [B, 1] f32

    kernel = functools.partial(_mixup_ce_kernel, n_rows=B, n_cols=C,
                               block_b=block_b, block_c=block_c)

    cost = pl.CostEstimate(
        flops=4 * B * C,
        transcendentals=B * C,
        bytes_accessed=B * C * itemsize + B * 4 + gb * 8 * 128 * 4,
    )

    partials = pl.pallas_call(
        kernel,
        out_shape=jax.ShapeDtypeStruct((gb, 8, 128), jnp.float32),
        grid_spec=pltpu.PrefetchScalarGridSpec(
            num_scalar_prefetch=0,
            grid=(gb, gc),
            in_specs=[
                pl.BlockSpec((block_b, block_c), lambda i, k: (i, k)),  # logits
                pl.BlockSpec((block_b, 1), lambda i, k: (i, 0)),        # gathered g
            ],
            out_specs=pl.BlockSpec((1, 8, 128), lambda i, k: (i, 0, 0)),
            scratch_shapes=[
                pltpu.VMEM((block_b, 1), jnp.float32),   # running row max
                pltpu.VMEM((block_b, 1), jnp.float32),   # running row sum-exp
            ],
        ),
        compiler_params=pltpu.CompilerParams(
            dimension_semantics=("parallel", "arbitrary"),
            vmem_limit_bytes=40 * 1024 * 1024,
        ),
        cost_estimate=cost,
    )(logits, g)

    # Final reduction + mean over the true batch size done once in the wrapper.
    return jnp.sum(partials[:, 0, 0]) / B


def _reference(logits, targets_a, targets_b, lam):
    logp = jax.nn.log_softmax(logits.astype(jnp.float32), axis=-1)
    ce_a = -jnp.mean(jnp.take_along_axis(
        logp, targets_a[:, None].astype(jnp.int32), axis=-1))
    ce_b = -jnp.mean(jnp.take_along_axis(
        logp, targets_b[:, None].astype(jnp.int32), axis=-1))
    return lam * ce_a + (1.0 - lam) * ce_b


if __name__ == "__main__":
    key = jax.random.PRNGKey(0)
    k1, k2, k3, k4, k5, k6 = jax.random.split(key, 6)

    # Case 1: single-tile path (B=8, C=32), f32 logits.
    B, C = 8, 32
    logits = jax.random.normal(k1, (B, C), dtype=jnp.float32)
    targets_a = jax.random.randint(k2, (B,), 0, C, dtype=jnp.int32)
    targets_b = jax.random.randint(k3, (B,), 0, C, dtype=jnp.int32)
    lam = jnp.float32(0.7)
    loss = jax.block_until_ready(
        mixup_cross_entropy(logits, targets_a, targets_b, lam))
    ref = _reference(logits, targets_a, targets_b, lam)
    assert jnp.allclose(loss, ref, atol=1e-5, rtol=1e-5), (loss, ref)

    # Case 2: tiled path with ragged batch AND class tiles (B=20, C=200),
    # forcing block_b=8, block_c=128 to exercise masking + parallel batch grid.
    B2, C2 = 20, 200
    logits2 = jax.random.normal(k4, (B2, C2), dtype=jnp.float32)
    ta2 = jax.random.randint(k5, (B2,), 0, C2, dtype=jnp.int32)
    tb2 = jax.random.randint(k6, (B2,), 0, C2, dtype=jnp.int32)
    lam2 = jnp.float32(0.3)
    loss2 = jax.block_until_ready(
        mixup_cross_entropy(logits2, ta2, tb2, lam2, block_b=8, block_c=128))
    ref2 = _reference(logits2, ta2, tb2, lam2)
    assert jnp.allclose(loss2, ref2, atol=1e-5, rtol=1e-5), (loss2, ref2)

    # Case 3: bf16 logits fed straight to the kernel (no wrapper-side upcast
    # of the streamed tensor; only the O(B) gather is done in f32).
    logits_bf16 = logits.astype(jnp.bfloat16)
    loss3 = jax.block_until_ready(
        mixup_cross_entropy(logits_bf16, targets_a, targets_b, lam))
    ref3 = _reference(logits_bf16, targets_a, targets_b, lam)
    assert jnp.allclose(loss3, ref3, atol=1e-2, rtol=1e-2), (loss3, ref3)

    print("KERNEL_OK")
</pallas_src>

<mosaic_0001>
module attributes {stable_mosaic.version = 11 : i64} {
  func.func @_mixup_ce_kernel(%arg0: i32, %arg1: i32, %arg2: memref<8x32xf32, #tpu.memory_space<vmem>>, %arg3: memref<8x1xf32, #tpu.memory_space<vmem>>, %arg4: memref<1x8x128xf32, #tpu.memory_space<vmem>>, %arg5: memref<8x1xf32, #tpu.memory_space<vmem>>, %arg6: memref<8x1xf32, #tpu.memory_space<vmem>>) attributes {dimension_semantics = [#tpu.dimension_semantics<parallel>, #tpu.dimension_semantics<arbitrary>], iteration_bounds = array<i64: 1, 1>, scalar_prefetch = 0 : i64, scratch_operands = 2 : i64, tpu.core_type = #tpu.core_type<tc>, window_params = [{transform_indices = @transform_0, window_bounds = array<i64: 8, 32>}, {transform_indices = @transform_1, window_bounds = array<i64: 8, 1>}, {transform_indices = @transform_2, window_bounds = array<i64: 1, 8, 128>}]} {
    %c0_i32 = arith.constant 0 : i32
    %0 = arith.cmpi eq, %arg1, %c0_i32 : i32
    %1 = arith.extui %0 : i1 to i32
    %c0_i32_0 = arith.constant 0 : i32
    %2 = arith.cmpi ne, %1, %c0_i32_0 : i32
    scf.if %2 {
      %cst_13 = arith.constant 0xFF800000 : f32
      %23 = vector.broadcast %cst_13 : f32 to vector<8x1xf32>
      %c0_14 = arith.constant 0 : index
      %c0_15 = arith.constant 0 : index
      %24 = vector.load %arg5[%c0_14, %c0_15] : memref<8x1xf32, #tpu.memory_space<vmem>>, vector<8x1xf32>
      tpu.vector_store %arg5[%c0_14, %c0_15], %23 {strides = array<i32>} : memref<8x1xf32, #tpu.memory_space<vmem>>, vector<8x1xf32>,
      %cst_16 = arith.constant 0.000000e+00 : f32
      %25 = vector.broadcast %cst_16 : f32 to vector<8x1xf32>
      %c0_17 = arith.constant 0 : index
      %c0_18 = arith.constant 0 : index
      %26 = vector.load %arg6[%c0_17, %c0_18] : memref<8x1xf32, #tpu.memory_space<vmem>>, vector<8x1xf32>
      tpu.vector_store %arg6[%c0_17, %c0_18], %25 {strides = array<i32>} : memref<8x1xf32, #tpu.memory_space<vmem>>, vector<8x1xf32>,
    } else {
    }
    %c0 = arith.constant 0 : index
    %c0_1 = arith.constant 0 : index
    %3 = vector.load %arg2[%c0, %c0_1] : memref<8x32xf32, #tpu.memory_space<vmem>>, vector<8x32xf32>
    %c0_2 = arith.constant 0 : index
    %c0_3 = arith.constant 0 : index
    %4 = vector.load %arg5[%c0_2, %c0_3] : memref<8x1xf32, #tpu.memory_space<vmem>>, vector<8x1xf32>
    %cst = arith.constant dense<0xFF800000> : vector<8xf32>
    %5 = vector.multi_reduction <maximumf>, %3, %cst [1] : vector<8x32xf32> to vector<8xf32>
    %6 = vector.shape_cast %5 : vector<8xf32> to vector<8x1xf32>
    %7 = arith.maximumf %4, %6 : vector<8x1xf32>
    %c0_4 = arith.constant 0 : index
    %c0_5 = arith.constant 0 : index
    %8 = vector.load %arg6[%c0_4, %c0_5] : memref<8x1xf32, #tpu.memory_space<vmem>>, vector<8x1xf32>
    %9 = arith.subf %4, %7 : vector<8x1xf32>
    %10 = math.exp %9 : vector<8x1xf32>
    %11 = arith.mulf %8, %10 : vector<8x1xf32>
    %12 = vector.broadcast %7 : vector<8x1xf32> to vector<8x32xf32>
    %13 = arith.subf %3, %12 : vector<8x32xf32>
    %14 = math.exp %13 : vector<8x32xf32>
    %cst_6 = arith.constant dense<0.000000e+00> : vector<8xf32>
    %15 = vector.multi_reduction <add>, %14, %cst_6 [1] : vector<8x32xf32> to vector<8xf32>
    %16 = vector.shape_cast %15 : vector<8xf32> to vector<8x1xf32>
    %17 = arith.addf %11, %16 : vector<8x1xf32>
    %c0_7 = arith.constant 0 : index
    %c0_8 = arith.constant 0 : index
    %18 = vector.load %arg6[%c0_7, %c0_8] : memref<8x1xf32, #tpu.memory_space<vmem>>, vector<8x1xf32>
    tpu.vector_store %arg6[%c0_7, %c0_8], %17 {strides = array<i32>} : memref<8x1xf32, #tpu.memory_space<vmem>>, vector<8x1xf32>,
    %c0_9 = arith.constant 0 : index
    %c0_10 = arith.constant 0 : index
    %19 = vector.load %arg5[%c0_9, %c0_10] : memref<8x1xf32, #tpu.memory_space<vmem>>, vector<8x1xf32>
    tpu.vector_store %arg5[%c0_9, %c0_10], %7 {strides = array<i32>} : memref<8x1xf32, #tpu.memory_space<vmem>>, vector<8x1xf32>,
    %c0_i32_11 = arith.constant 0 : i32
    %20 = arith.cmpi eq, %arg1, %c0_i32_11 : i32
    %21 = arith.extui %20 : i1 to i32
    %c0_i32_12 = arith.constant 0 : i32
    %22 = arith.cmpi ne, %21, %c0_i32_12 : i32
    scf.if %22 {
      %c0_13 = arith.constant 0 : index
      %c0_14 = arith.constant 0 : index
      %23 = vector.load %arg5[%c0_13, %c0_14] : memref<8x1xf32, #tpu.memory_space<vmem>>, vector<8x1xf32>
      %c0_15 = arith.constant 0 : index
      %c0_16 = arith.constant 0 : index
      %24 = vector.load %arg6[%c0_15, %c0_16] : memref<8x1xf32, #tpu.memory_space<vmem>>, vector<8x1xf32>
      %25 = math.log %24 : vector<8x1xf32>
      %26 = arith.addf %23, %25 : vector<8x1xf32>
      %c0_17 = arith.constant 0 : index
      %c0_18 = arith.constant 0 : index
      %27 = vector.load %arg3[%c0_17, %c0_18] : memref<8x1xf32, #tpu.memory_space<vmem>>, vector<8x1xf32>
      %28 = arith.subf %26, %27 : vector<8x1xf32>
      %29 = vector.shape_cast %28 : vector<8x1xf32> to vector<1x8x1xf32>
      %cst_19 = arith.constant dense<0.000000e+00> : vector<1xf32>
      %30 = vector.multi_reduction <add>, %29, %cst_19 [1, 2] : vector<1x8x1xf32> to vector<1xf32>
      %31 = vector.shape_cast %30 : vector<1xf32> to vector<1x1x1xf32>
      %32 = vector.extract %31[0, 0, 0] : f32 from vector<1x1x1xf32>
      %33 = vector.broadcast %32 : f32 to vector<1x8x128xf32>
      %c0_20 = arith.constant 0 : index
      %c0_21 = arith.constant 0 : index
      %c0_22 = arith.constant 0 : index
      %34 = vector.load %arg4[%c0_20, %c0_21, %c0_22] : memref<1x8x128xf32, #tpu.memory_space<vmem>>, vector<1x8x128xf32>
      tpu.vector_store %arg4[%c0_20, %c0_21, %c0_22], %33 {strides = array<i32>} : memref<1x8x128xf32, #tpu.memory_space<vmem>>, vector<1x8x128xf32>,
    } else {
    }
    return
  }
  func.func @transform_0(%arg0: i32, %arg1: i32) -> (i32, i32) {
    %c0_i32 = arith.constant 0 : i32
    return %arg0, %arg1 : i32, i32
  }
  func.func @transform_1(%arg0: i32, %arg1: i32) -> (i32, i32) {
    %c0_i32 = arith.constant 0 : i32
    %c0_i32_0 = arith.constant 0 : i32
    return %arg0, %c0_i32 : i32, i32
  }
  func.func @transform_2(%arg0: i32, %arg1: i32) -> (i32, i32, i32) {
    %c0_i32 = arith.constant 0 : i32
    %c0_i32_0 = arith.constant 0 : i32
    %c0_i32_1 = arith.constant 0 : i32
    return %arg0, %c0_i32, %c0_i32_0 : i32, i32, i32
  }
}

</mosaic_0001>

<llo_original>
// kernel: tpu_custom_call.1
$region0: #{tpu_custom_call.1}
  #allocation0 [shape = 'u32[]', space=smem, size = 0x4, offset = 0x4, fixed_abs, tag = 'smem constant byte address 0x4 - core index']
  #allocation1 [shape = 'u32[144,128]{1,0:T(1,128)}', space=vmem, size = 0x12000, scoped, tag = 'internal scratch']
  #allocation2 [shape = 'f32[8,1]{1,0:T(8,128)}', space=vmem, size = 0x1000, scoped, tag = 'scratch operand']
  #allocation3 [shape = 'f32[8,1]{1,0:T(8,128)}', space=vmem, size = 0x1000, scoped, tag = 'scratch operand']
  %s0 = inlined_call_operand.vmem [shape: f32[8,32], index: 0, kind: input, shape index: {}]
  %s1 = inlined_call_operand.vmem [shape: f32[8,1], index: 1, kind: input, shape index: {}]
  %s2 = inlined_call_operand.hbm [shape: f32[1,8,128], index: 2, kind: output, shape index: {}]
  %s3 = sld [smem:[#allocation0]]
  $region26: #{tpu_custom_call.1} parent=0
    _
  %s5 = ssub.s32 1, %s3
  %s6 = scalar_select 0, %s5, %s3
  $region1: #{tpu_custom_call.1} parent=0
    #allocation4 [shape = 'u8[4096]{0}', space=vmem, size = 0x1000, scoped, tag = 'output window, operand 0, single buffered']
    #allocation5 [shape = 's32[1]{0}', space=sflag, size = 0x4, scoped, tag = 'scoped memory for tpu_custom_call.1']
    %7 = vsyncpa [#allocation5], 0
    // Predicated region
    $region2: #{tpu_custom_call.1} parent=1 // pred_check
      _
    $region3: #{tpu_custom_call.1} parent=1 // pred_check_branch
      %9 = sbr.rel (0) target = $region5
    $region4: #{tpu_custom_call.1} parent=1 // pred_region
      _
    $region5: #{tpu_custom_call.1} parent=1 // pred_fallthru
      _
    // Predicated region
    $region6: #{tpu_custom_call.1} parent=1 // pred_check
      _
    $region7: #{tpu_custom_call.1} parent=1 // pred_check_branch
      %11 = sbr.rel (0) target = $region9
    $region8: #{tpu_custom_call.1} parent=1 // pred_region
      _
    $region9: #{tpu_custom_call.1} parent=1 // pred_fallthru
      _
    %p12 = scmp.eq.s32.totalorder 0, 0
    // Predicated region
    $region10: #{tpu_custom_call.1} parent=1 // pred_check
      %p13 = pneg %p12
    $region11: #{tpu_custom_call.1} parent=1 // pred_check_branch
      %15 = sbr.rel (%p13) target = $region13
    $region12: #{tpu_custom_call.1} parent=1 // pred_region
      %vm16 = vcmask 7168
      %17 = vst.msk [vmem:[#allocation2] sm:$0xff] %vm16, -inf
      %18 = vst.msk [vmem:[#allocation3] sm:$0xff] %vm16, 0.0
    $region13: #{tpu_custom_call.1} parent=1 // pred_fallthru
      _
    %v19 = vld [vmem:[%s0] sm:$0xff]
    %v20 = vld [vmem:[#allocation2] sm:$0xff]
    %vm21 = vcmask 261120
    %v22 = vsel %vm21, %v19, -inf
    %23 = vmax.xlane.f32.xlu0 %v22
    %v24 = vpop.xlane.xlu0 %23
    %v25 = vmax.f32 %v20, %v24
    %v26 = vld [vmem:[#allocation3] sm:$0xff]
    %v27 = vsub.f32 %v20, %v25
    %v28 = vmul.f32 %v27, 1.442695
    %v29 = vpow.pop %v28
    %v30 = vmul.f32 %v26, %v29
    %32 = vset.pattern.permute.xlu0 0
    %33 = vperm.xlu0 %32, %v25
    %v34 = vpop.permute.xlu0 %33
    %v36 = vsub.f32 %v19, %v34
    %v37 = vmul.f32 %v36, 1.442695
    %v38 = vpow.pop %v37
    %v39 = vsel %vm21, %v38, 0.0
    %40 = vadd.xlane.f32.xlu0 %v39
    %v41 = vpop.xlane.xlu0 %40
    %v42 = vadd.f32 %v30, %v41
    %vm43 = vcmask 7168
    %44 = vst.msk [vmem:[#allocation3] sm:$0xff] %vm43, %v42
    %45 = vst.msk [vmem:[#allocation2] sm:$0xff] %vm43, %v25
    // Predicated region
    $region14: #{tpu_custom_call.1} parent=1 // pred_check
      %p46 = pneg %p12
    $region15: #{tpu_custom_call.1} parent=1 // pred_check_branch
      %48 = sbr.rel (%p46) target = $region17
    $region16: #{tpu_custom_call.1} parent=1 // pred_region
      %v49 = vld [vmem:[#allocation2] sm:$0xff]
      %v50 = vld [vmem:[#allocation3] sm:$0xff]
      %v51 = vlog2.pop %v50
      %v52 = vmul.f32 %v51, 0.6931472
      %v53 = vadd.f32 %v49, %v52
      %v54 = vld [vmem:[%s1] sm:$0xff]
      %v55 = vsub.f32 %v53, %v54
      %v56 = vsel %vm43, %v55, 0.0
      %57 = vadd.xlane.f32.xlu0 %v56
      %v58 = vpop.xlane.xlu0 %57
      %v59 = vrot.slane %v58, 4
      %v60 = vadd.f32 %v58, %v59
      %v61 = vrot.slane %v60, 2
      %v62 = vadd.f32 %v60, %v61
      %v63 = vrot.slane %v62, 1
      %v64 = vadd.f32 %v62, %v63
      %s65 = vtos %v64
      %v66 = vstv %s65
      %67 = vst [vmem:[#allocation4] sm:$0xff] %v66
    $region17: #{tpu_custom_call.1} parent=1 // pred_fallthru
      _
    // Predicated region
    $region18: #{tpu_custom_call.1} parent=1 // pred_check
      _
    $region19: #{tpu_custom_call.1} parent=1 // pred_check_branch
      %69 = sbr.rel (0) target = $region21
    $region20: #{tpu_custom_call.1} parent=1 // pred_region
      %s71 = ssub.s32 128, 128
      %72 = vsyncadd [#allocation5], %s71
      %s74 = sshll.u32 [#allocation4], 4
      %s75 = int_to_ptr.vmem [resolvable:$true] %s74
      %77 = dma.vmem_to_hbm [thread:$0]  %s75, 128, %s2, [#allocation5]
    $region21: #{tpu_custom_call.1} parent=1 // pred_fallthru
      _
    // Predicated region
    $region22: #{tpu_custom_call.1} parent=1 // pred_check
      _
    $region23: #{tpu_custom_call.1} parent=1 // pred_check_branch
      %79 = sbr.rel (0) target = $region25
    $region24: #{tpu_custom_call.1} parent=1 // pred_region
      %80 = dma.done [#allocation5], 128
    $region25: #{tpu_custom_call.1} parent=1 // pred_fallthru
      _
    %81 = vsyncpa [#allocation5], 1

</llo_original>
